<compile_context>
chip_gen: v7x
topology: tpu7x:2x2x1
jax: 0.10.0
libtpu: 0.0.40
codegen_flags: <defaults>
</compile_context>

<pallas_src>
import functools

import jax
import jax.numpy as jnp
from jax.experimental import pallas as pl
from jax.experimental.pallas import tpu as pltpu

LANES = 128
MAX_BLOCK_ROWS = 4096          # (4096, 128) f32 = 2 MiB per input block


def _round_up(v, m):
    return (v + m - 1) // m * m


def _num_tensorcores():
    """Best-effort query of TensorCores per chip (2 on v7x, 1 on v5e/v6e)."""
    try:
        info = pltpu.get_tpu_info()
    except Exception:
        info = None
    if info is not None:
        for attr in ("num_cores", "num_tensorcores", "tensorcores_per_chip",
                     "cores_per_chip", "core_count"):
            v = getattr(info, attr, None)
            if isinstance(v, int) and v > 0:
                return v
    return int(getattr(jax.devices()[0], "num_cores", 1) or 1)


def _pointwise_kl(x, y):
    # xlogy(y, y) - y * x ;  y == 0 -> 0,  y < 0 -> NaN (matches torch).
    pos = y > 0.0
    xlogy_yy = jnp.where(pos, y * jnp.log(jnp.where(pos, y, 1.0)), 0.0)
    xlogy_yy = jnp.where(y < 0.0, jnp.nan, xlogy_yy)
    return xlogy_yy - y * x


def _fold8(v, block_rows):
    # (block_rows, 128) -> (8, 128) with pure VPU adds; the single cross-lane
    # reduction happens once in the wrapper.
    return v.reshape(block_rows // 8, 8, LANES).sum(axis=0)


def _kl_div_sum_kernel(x_ref, y_ref, o_ref, *, rows, block_rows, steps):
    c = pl.program_id(0)   # parallel chunk (megacore axis)
    s = pl.program_id(1)   # reduction step within the chunk

    @pl.when(s == 0)
    def _():
        o_ref[...] = jnp.zeros_like(o_ref)

    loss = _pointwise_kl(x_ref[...], y_ref[...])

    # Unclamped element-row base of this step.  Only blocks that extend past
    # the end of the array (ragged tail, or the clamped duplicate block of an
    # uneven chunk split, where base >= rows) need the row-validity mask.
    base = (c * steps + s) * block_rows
    is_tail = base + block_rows > rows

    @pl.when(jnp.logical_not(is_tail))
    def _():
        o_ref[...] += _fold8(loss, block_rows)

    @pl.when(is_tail)
    def _():
        row_ids = base + jax.lax.broadcasted_iota(
            jnp.int32, (block_rows, LANES), 0)
        o_ref[...] += _fold8(jnp.where(row_ids < rows, loss, 0.0), block_rows)


def _kl_div_sum_ref(x, y):
    return jnp.sum(_pointwise_kl(x, y))


def kl_div_sum(x, y, *, min_kernel_elems=128 * 1024):
    assert x.shape == y.shape
    # TODO(synk): if callers ever pass bf16/fp16, stream the native dtype and
    # upcast in-kernel instead of materializing an f32 copy in HBM.
    x = x.astype(jnp.float32)
    y = y.astype(jnp.float32)

    n = x.size
    if n == 0:
        return jnp.float32(0.0)
    if n < min_kernel_elems:
        # pallas_call fixed cost + pad copy dominate tiny shapes; jnp is faster.
        return _kl_div_sum_ref(x, y)

    xf = x.reshape(-1)
    yf = y.reshape(-1)

    # Pad to a whole number of (8, 128) tiles; zero padding (y == 0, x == 0)
    # contributes exactly 0 to the sum.
    padded_n = _round_up(n, 8 * LANES)
    pad = padded_n - n
    if pad:
        xf = jnp.pad(xf, (0, pad))
        yf = jnp.pad(yf, (0, pad))

    rows = padded_n // LANES
    x2 = xf.reshape(rows, LANES)
    y2 = yf.reshape(rows, LANES)

    block_rows = min(MAX_BLOCK_ROWS, rows)
    total_blocks = pl.cdiv(rows, block_rows)
    n_par = 2 if (total_blocks >= 2 and _num_tensorcores() >= 2) else 1
    steps = pl.cdiv(total_blocks, n_par)
    last_block = total_blocks - 1

    def in_map(c, s):
        # Clamp so the (rare) extra step of an uneven split stays in bounds;
        # its rows are fully masked out in-kernel (base >= rows there).
        return (jnp.minimum(c * steps + s, last_block), 0)

    kernel = functools.partial(
        _kl_div_sum_kernel, rows=rows, block_rows=block_rows, steps=steps)

    partials = pl.pallas_call(
        kernel,
        out_shape=jax.ShapeDtypeStruct((n_par * 8, LANES), jnp.float32),
        grid_spec=pltpu.PrefetchScalarGridSpec(
            num_scalar_prefetch=0,
            grid=(n_par, steps),
            in_specs=[
                pl.BlockSpec((block_rows, LANES), in_map),
                pl.BlockSpec((block_rows, LANES), in_map),
            ],
            out_specs=pl.BlockSpec((8, LANES), lambda c, s: (c, 0)),
        ),
        compiler_params=pltpu.CompilerParams(
            dimension_semantics=("parallel", "arbitrary")),
        cost_estimate=pl.CostEstimate(
            flops=6 * n, transcendentals=n, bytes_accessed=8 * n),
    )(x2, y2)

    # Single small cross-lane reduction of the per-chunk (8, 128) partials.
    return jnp.sum(partials)


if __name__ == "__main__":
    key = jax.random.PRNGKey(0)
    kx, ky = jax.random.split(key)

    B, C, L = 2, 4, 16  # small rank-3 shapes consistent with ([-1,-1,-1], f32)
    # x plays the role of log-probabilities, y of target probabilities.
    x = jax.nn.log_softmax(
        jax.random.normal(kx, (B, C, L), dtype=jnp.float32), axis=-1)
    y = jax.nn.softmax(
        jax.random.normal(ky, (B, C, L), dtype=jnp.float32), axis=-1)

    # min_kernel_elems=0 forces the Pallas path even at this tiny test shape.
    result = jax.block_until_ready(kl_div_sum(x, y, min_kernel_elems=0))

    # Silent correctness check against a pure-JAX reference.
    ref = jnp.sum(
        jnp.where(y > 0, y * jnp.log(jnp.where(y > 0, y, 1.0)), 0.0) - y * x)
    assert jnp.allclose(result, ref, rtol=1e-5, atol=1e-5), (result, ref)

    print("KERNEL_OK")
</pallas_src>

<mosaic_0001>
module attributes {stable_mosaic.version = 11 : i64} {
  func.func @_kl_div_sum_kernel(%arg0: i32, %arg1: i32, %arg2: memref<8x128xf32, #tpu.memory_space<vmem>>, %arg3: memref<8x128xf32, #tpu.memory_space<vmem>>, %arg4: memref<8x128xf32, #tpu.memory_space<vmem>>) attributes {dimension_semantics = [#tpu.dimension_semantics<parallel>, #tpu.dimension_semantics<arbitrary>], iteration_bounds = array<i64: 1, 1>, scalar_prefetch = 0 : i64, scratch_operands = 0 : i64, tpu.core_type = #tpu.core_type<tc>, window_params = [{transform_indices = @transform_0, window_bounds = array<i64: 8, 128>}, {transform_indices = @transform_1, window_bounds = array<i64: 8, 128>}, {transform_indices = @transform_2, window_bounds = array<i64: 8, 128>}]} {
    %c0_i32 = arith.constant 0 : i32
    %0 = arith.cmpi eq, %arg1, %c0_i32 : i32
    %1 = arith.extui %0 : i1 to i32
    %c0_i32_0 = arith.constant 0 : i32
    %2 = arith.cmpi ne, %1, %c0_i32_0 : i32
    scf.if %2 {
      %cst_12 = arith.constant 0.000000e+00 : f32
      %29 = vector.broadcast %cst_12 : f32 to vector<8x128xf32>
      %c0_13 = arith.constant 0 : index
      %c0_14 = arith.constant 0 : index
      %30 = vector.load %arg4[%c0_13, %c0_14] : memref<8x128xf32, #tpu.memory_space<vmem>>, vector<8x128xf32>
      tpu.vector_store %arg4[%c0_13, %c0_14], %29 {strides = array<i32>} : memref<8x128xf32, #tpu.memory_space<vmem>>, vector<8x128xf32>,
    } else {
    }
    %c0 = arith.constant 0 : index
    %c0_1 = arith.constant 0 : index
    %3 = vector.load %arg2[%c0, %c0_1] : memref<8x128xf32, #tpu.memory_space<vmem>>, vector<8x128xf32>
    %c0_2 = arith.constant 0 : index
    %c0_3 = arith.constant 0 : index
    %4 = vector.load %arg3[%c0_2, %c0_3] : memref<8x128xf32, #tpu.memory_space<vmem>>, vector<8x128xf32>
    %cst = arith.constant 0.000000e+00 : f32
    %5 = vector.broadcast %cst : f32 to vector<8x128xf32>
    %6 = arith.cmpf ogt, %4, %5 : vector<8x128xf32>
    %cst_4 = arith.constant 1.000000e+00 : f32
    %7 = vector.broadcast %cst_4 : f32 to vector<8x128xf32>
    %8 = arith.select %6, %4, %7 : vector<8x128xi1>, vector<8x128xf32>
    %9 = math.log %8 : vector<8x128xf32>
    %10 = arith.mulf %4, %9 : vector<8x128xf32>
    %cst_5 = arith.constant 0.000000e+00 : f32
    %11 = vector.broadcast %cst_5 : f32 to vector<8x128xf32>
    %12 = arith.select %6, %10, %11 : vector<8x128xi1>, vector<8x128xf32>
    %cst_6 = arith.constant 0.000000e+00 : f32
    %13 = vector.broadcast %cst_6 : f32 to vector<8x128xf32>
    %14 = arith.cmpf olt, %4, %13 : vector<8x128xf32>
    %cst_7 = arith.constant 0x7FC00000 : f32
    %15 = vector.broadcast %cst_7 : f32 to vector<8x128xf32>
    %16 = arith.select %14, %15, %12 : vector<8x128xi1>, vector<8x128xf32>
    %17 = arith.mulf %4, %3 : vector<8x128xf32>
    %18 = arith.subf %16, %17 : vector<8x128xf32>
    %c1_i32 = arith.constant 1 : i32
    %19 = arith.muli %arg0, %c1_i32 : i32
    %20 = arith.addi %19, %arg1 : i32
    %c8_i32 = arith.constant 8 : i32
    %21 = arith.muli %20, %c8_i32 : i32
    %c8_i32_8 = arith.constant 8 : i32
    %22 = arith.addi %21, %c8_i32_8 : i32
    %c8_i32_9 = arith.constant 8 : i32
    %23 = arith.cmpi sgt, %22, %c8_i32_9 : i32
    %true = arith.constant true
    %24 = arith.xori %23, %true : i1
    %25 = arith.extui %24 : i1 to i32
    %c0_i32_10 = arith.constant 0 : i32
    %26 = arith.cmpi ne, %25, %c0_i32_10 : i32
    scf.if %26 {
      %c0_12 = arith.constant 0 : index
      %c0_13 = arith.constant 0 : index
      %29 = vector.load %arg4[%c0_12, %c0_13] : memref<8x128xf32, #tpu.memory_space<vmem>>, vector<8x128xf32>
      %30 = vector.shape_cast %18 : vector<8x128xf32> to vector<1x8x128xf32>
      %cst_14 = arith.constant dense<0.000000e+00> : vector<8x128xf32>
      %31 = vector.multi_reduction <add>, %30, %cst_14 [0] : vector<1x8x128xf32> to vector<8x128xf32>
      %32 = arith.addf %29, %31 : vector<8x128xf32>
      %c0_15 = arith.constant 0 : index
      %c0_16 = arith.constant 0 : index
      %33 = vector.load %arg4[%c0_15, %c0_16] : memref<8x128xf32, #tpu.memory_space<vmem>>, vector<8x128xf32>
      tpu.vector_store %arg4[%c0_15, %c0_16], %32 {strides = array<i32>} : memref<8x128xf32, #tpu.memory_space<vmem>>, vector<8x128xf32>,
    } else {
    }
    %27 = arith.extui %23 : i1 to i32
    %c0_i32_11 = arith.constant 0 : i32
    %28 = arith.cmpi ne, %27, %c0_i32_11 : i32
    scf.if %28 {
      %29 = tpu.iota {dimensions = array<i32: 0>} : vector<8x128xi32>
      %30 = vector.broadcast %21 : i32 to vector<8x128xi32>
      %31 = arith.addi %30, %29 : vector<8x128xi32>
      %c0_12 = arith.constant 0 : index
      %c0_13 = arith.constant 0 : index
      %32 = vector.load %arg4[%c0_12, %c0_13] : memref<8x128xf32, #tpu.memory_space<vmem>>, vector<8x128xf32>
      %c8_i32_14 = arith.constant 8 : i32
      %33 = vector.broadcast %c8_i32_14 : i32 to vector<8x128xi32>
      %34 = arith.cmpi slt, %31, %33 : vector<8x128xi32>
      %cst_15 = arith.constant 0.000000e+00 : f32
      %35 = vector.broadcast %cst_15 : f32 to vector<8x128xf32>
      %36 = arith.select %34, %18, %35 : vector<8x128xi1>, vector<8x128xf32>
      %37 = vector.shape_cast %36 : vector<8x128xf32> to vector<1x8x128xf32>
      %cst_16 = arith.constant dense<0.000000e+00> : vector<8x128xf32>
      %38 = vector.multi_reduction <add>, %37, %cst_16 [0] : vector<1x8x128xf32> to vector<8x128xf32>
      %39 = arith.addf %32, %38 : vector<8x128xf32>
      %c0_17 = arith.constant 0 : index
      %c0_18 = arith.constant 0 : index
      %40 = vector.load %arg4[%c0_17, %c0_18] : memref<8x128xf32, #tpu.memory_space<vmem>>, vector<8x128xf32>
      tpu.vector_store %arg4[%c0_17, %c0_18], %39 {strides = array<i32>} : memref<8x128xf32, #tpu.memory_space<vmem>>, vector<8x128xf32>,
    } else {
    }
    return
  }
  func.func @transform_0(%arg0: i32, %arg1: i32) -> (i32, i32) {
    %c1_i32 = arith.constant 1 : i32
    %0 = arith.muli %arg0, %c1_i32 : i32
    %1 = arith.addi %0, %arg1 : i32
    %c0_i32 = arith.constant 0 : i32
    %2 = arith.minsi %1, %c0_i32 : i32
    %c0_i32_0 = arith.constant 0 : i32
    %c0_i32_1 = arith.constant 0 : i32
    return %2, %c0_i32_0 : i32, i32
  }
  func.func @transform_1(%arg0: i32, %arg1: i32) -> (i32, i32) {
    %c1_i32 = arith.constant 1 : i32
    %0 = arith.muli %arg0, %c1_i32 : i32
    %1 = arith.addi %0, %arg1 : i32
    %c0_i32 = arith.constant 0 : i32
    %2 = arith.minsi %1, %c0_i32 : i32
    %c0_i32_0 = arith.constant 0 : i32
    %c0_i32_1 = arith.constant 0 : i32
    return %2, %c0_i32_0 : i32, i32
  }
  func.func @transform_2(%arg0: i32, %arg1: i32) -> (i32, i32) {
    %c0_i32 = arith.constant 0 : i32
    %c0_i32_0 = arith.constant 0 : i32
    return %arg0, %c0_i32 : i32, i32
  }
}

</mosaic_0001>

<llo_original>
// kernel: tpu_custom_call.1
$region0: #{tpu_custom_call.1}
  #allocation0 [shape = 'u32[]', space=smem, size = 0x4, offset = 0x4, fixed_abs, tag = 'smem constant byte address 0x4 - core index']
  #allocation1 [shape = 'u32[144,128]{1,0:T(1,128)}', space=vmem, size = 0x12000, scoped, tag = 'internal scratch']
  %s0 = inlined_call_operand.hbm [shape: f32[8,128], index: 0, kind: input, shape index: {}]
  %s1 = inlined_call_operand.hbm [shape: f32[8,128], index: 1, kind: input, shape index: {}]
  %s2 = inlined_call_operand.hbm [shape: f32[8,128], index: 2, kind: output, shape index: {}]
  %s3 = sld [smem:[#allocation0]]
  $region38: #{tpu_custom_call.1} parent=0
    _
  %s5 = ssub.s32 1, %s3
  %s6 = scalar_select 0, %s5, %s3
  $region1: #{tpu_custom_call.1} parent=0
    #allocation2 [shape = 'u8[4096]{0}', space=vmem, size = 0x1000, scoped, tag = 'input window, operand 0, single buffered']
    #allocation3 [shape = 's32[1]{0}', space=sflag, size = 0x4, scoped, tag = 'scoped memory for tpu_custom_call.1']
    #allocation4 [shape = 's32[1]{0}', space=sflag, size = 0x4, scoped, tag = 'scoped memory for tpu_custom_call.1']
    #allocation5 [shape = 'u8[4096]{0}', space=vmem, size = 0x1000, scoped, tag = 'input window, operand 1, single buffered']
    #allocation6 [shape = 's32[1]{0}', space=sflag, size = 0x4, scoped, tag = 'scoped memory for tpu_custom_call.1']
    #allocation7 [shape = 'u8[4096]{0}', space=vmem, size = 0x1000, scoped, tag = 'output window, operand 0, single buffered']
    %7 = vsyncpa [#allocation3], 0
    %8 = vsyncpa [#allocation6], 0
    %9 = vsyncpa [#allocation4], 0
    // Predicated region
    $region2: #{tpu_custom_call.1} parent=1 // pred_check
      _
    $region3: #{tpu_custom_call.1} parent=1 // pred_check_branch
      %11 = sbr.rel (0) target = $region5
    $region4: #{tpu_custom_call.1} parent=1 // pred_region
      %s12 = sadd.s32 0, 0
      %p13 = scmp.lt.s32.totalorder %s12, 0
      %s14 = scalar_select %p13, %s12, 0
      %s16 = ssub.s32 128, 128
      %17 = vsyncadd [#allocation3], %s16
      %s18 = smul.addr %s14, 128
      %s19 = scalar_lea.hbm %s0, %s18
      %s21 = sshll.u32 [#allocation2], 4
      %s22 = int_to_ptr.vmem [resolvable:$true] %s21
      %24 = dma.hbm_to_vmem [thread:$0]  %s19, 128, %s22, [#allocation3]
    $region5: #{tpu_custom_call.1} parent=1 // pred_fallthru
      _
    // Predicated region
    $region6: #{tpu_custom_call.1} parent=1 // pred_check
      _
    $region7: #{tpu_custom_call.1} parent=1 // pred_check_branch
      %26 = sbr.rel (0) target = $region9
    $region8: #{tpu_custom_call.1} parent=1 // pred_region
      %s27 = sadd.s32 0, 0
      %p28 = scmp.lt.s32.totalorder %s27, 0
      %s29 = scalar_select %p28, %s27, 0
      %s31 = ssub.s32 128, 128
      %32 = vsyncadd [#allocation6], %s31
      %s33 = smul.addr %s29, 128
      %s34 = scalar_lea.hbm %s1, %s33
      %s36 = sshll.u32 [#allocation5], 4
      %s37 = int_to_ptr.vmem [resolvable:$true] %s36
      %39 = dma.hbm_to_vmem [thread:$0]  %s34, 128, %s37, [#allocation6]
    $region9: #{tpu_custom_call.1} parent=1 // pred_fallthru
      _
    // Predicated region
    $region10: #{tpu_custom_call.1} parent=1 // pred_check
      _
    $region11: #{tpu_custom_call.1} parent=1 // pred_check_branch
      %41 = sbr.rel (0) target = $region13
    $region12: #{tpu_custom_call.1} parent=1 // pred_region
      %42 = dma.done [#allocation3], 128
    $region13: #{tpu_custom_call.1} parent=1 // pred_fallthru
      _
    // Predicated region
    $region14: #{tpu_custom_call.1} parent=1 // pred_check
      _
    $region15: #{tpu_custom_call.1} parent=1 // pred_check_branch
      %44 = sbr.rel (0) target = $region17
    $region16: #{tpu_custom_call.1} parent=1 // pred_region
      %45 = dma.done [#allocation6], 128
    $region17: #{tpu_custom_call.1} parent=1 // pred_fallthru
      _
    %s46 = sadd.s32 0, 0
    %p47 = scmp.lt.s32.totalorder %s46, 0
    %s48 = scalar_select %p47, %s46, 0
    %s49 = sadd.s32 0, 0
    %p50 = scmp.lt.s32.totalorder %s49, 0
    %s51 = scalar_select %p50, %s49, 0
    %p52 = scmp.eq.s32.totalorder 0, 0
    // Predicated region
    $region18: #{tpu_custom_call.1} parent=1 // pred_check
      %p53 = pneg %p52
    $region19: #{tpu_custom_call.1} parent=1 // pred_check_branch
      %55 = sbr.rel (%p53) target = $region21
    $region20: #{tpu_custom_call.1} parent=1 // pred_region
      %56 = vst [vmem:[#allocation7] sm:$0xff] 0.0
    $region21: #{tpu_custom_call.1} parent=1 // pred_fallthru
      _
    %v57 = vld [vmem:[#allocation2] sm:$0xff]
    %v58 = vld [vmem:[#allocation5] sm:$0xff]
    %vm59 = vcmp.gt.f32.partialorder %v58, 0.0
    %v60 = vsel %vm59, %v58, 1.0
    %v61 = vlog2.pop %v60
    %v62 = vmul.f32 %v61, 0.6931472
    %v63 = vmul.f32 %v58, %v62
    %v64 = vsel %vm59, %v63, 0.0
    %vm65 = vcmp.lt.f32.partialorder %v58, 0.0
    %v66 = vsel %vm65, nan, %v64
    %v67 = vmul.f32 %v58, %v57
    %v68 = vsub.f32 %v66, %v67
    %s69 = sadd.s32 0, 0
    %s70 = smul.u32 %s69, 8
    %s71 = sadd.s32 %s70, 8
    %p72 = scmp.gt.s32.totalorder %s71, 8
    %p73 = scmp.le.s32.totalorder %s71, 8
    // Predicated region
    $region22: #{tpu_custom_call.1} parent=1 // pred_check
      %p74 = pneg %p73
    $region23: #{tpu_custom_call.1} parent=1 // pred_check_branch
      %76 = sbr.rel (%p74) target = $region25
    $region24: #{tpu_custom_call.1} parent=1 // pred_region
      %v77 = vld [vmem:[#allocation7] sm:$0xff]
      %v78 = vadd.f32 %v68, 0.0
      %v79 = vadd.f32 %v77, %v78
      %80 = vst [vmem:[#allocation7] sm:$0xff] %v79
    $region25: #{tpu_custom_call.1} parent=1 // pred_fallthru
      _
    // Predicated region
    $region26: #{tpu_custom_call.1} parent=1 // pred_check
      %p81 = pneg %p72
    $region27: #{tpu_custom_call.1} parent=1 // pred_check_branch
      %83 = sbr.rel (%p81) target = $region29
    $region28: #{tpu_custom_call.1} parent=1 // pred_region
      %v84 = vlaneseq
      %v85 = vshrl.u32 %v84, 7
      %v86 = vstv %s70
      %v87 = vadd.s32 %v86, %v85
      %v88 = vld [vmem:[#allocation7] sm:$0xff]
      %vm89 = vcmp.lt.s32.totalorder %v87, 8
      %v90 = vsel %vm89, %v68, 0.0
      %v91 = vadd.f32 %v90, 0.0
      %v92 = vadd.f32 %v88, %v91
      %93 = vst [vmem:[#allocation7] sm:$0xff] %v92
    $region29: #{tpu_custom_call.1} parent=1 // pred_fallthru
      _
    // Predicated region
    $region30: #{tpu_custom_call.1} parent=1 // pred_check
      _
    $region31: #{tpu_custom_call.1} parent=1 // pred_check_branch
      %95 = sbr.rel (0) target = $region33
    $region32: #{tpu_custom_call.1} parent=1 // pred_region
      %s97 = ssub.s32 128, 128
      %98 = vsyncadd [#allocation4], %s97
      %s100 = sshll.u32 [#allocation7], 4
      %s101 = int_to_ptr.vmem [resolvable:$true] %s100
      %103 = dma.vmem_to_hbm [thread:$0]  %s101, 128, %s2, [#allocation4]
    $region33: #{tpu_custom_call.1} parent=1 // pred_fallthru
      _
    // Predicated region
    $region34: #{tpu_custom_call.1} parent=1 // pred_check
      _
    $region35: #{tpu_custom_call.1} parent=1 // pred_check_branch
      %105 = sbr.rel (0) target = $region37
    $region36: #{tpu_custom_call.1} parent=1 // pred_region
      %106 = dma.done [#allocation4], 128
    $region37: #{tpu_custom_call.1} parent=1 // pred_fallthru
      _
    %107 = vsyncpa [#allocation3], 1
    %108 = vsyncpa [#allocation6], 1
    %109 = vsyncpa [#allocation4], 1

</llo_original>
